<compile_context>
chip_gen: v7x
topology: tpu7x:2x2x1
jax: 0.10.0
libtpu: 0.0.40
codegen_flags: <defaults>
</compile_context>

<pallas_src>
import jax
import jax.numpy as jnp
from jax import lax
from jax.experimental import pallas as pl
from jax.experimental.pallas import tpu as pltpu

_LANE = 128  # TPU lane width / MXU-friendly padding unit


def _round_up(x, m):
    return ((x + m - 1) // m) * m


def _mlp_kernel(x_ref, w1_ref, b1_ref, w2_ref, b2_ref, o_ref):
    # ---- Layer 1 (MXU): [tn, F] @ [F, Hp] -> [tn, Hp], f32 accumulate -------
    # X arrives as f32 straight from HBM; cast to the (bf16) weight dtype on
    # the VPU just before the dot (free under the memory bound).
    x = x_ref[...].astype(w1_ref.dtype)
    h = jnp.dot(x, w1_ref[...], preferred_element_type=jnp.float32)
    h = jnp.maximum(h + b1_ref[...], 0.0)                       # f32 bias+ReLU (VPU)

    # ---- Layer 2, lane-dense scalar output ----------------------------------
    # Contract w2^T [1, Hp] with h's hidden (last) axis -> [1, tn]: one f32
    # scalar per sample, laid out densely along lanes. Padded hidden units are
    # exactly zero (zero W1 cols, zero b1) so they contribute nothing.
    y = lax.dot_general(w2_ref[...], h,
                        dimension_numbers=(((1,), (1,)), ((), ())),
                        preferred_element_type=jnp.float32)      # [1, tn]
    y = y + b2_ref[...]                                          # [1,1] broadcast
    o_ref[...] = y[None].astype(o_ref.dtype)                     # [1, 1, tn]


def _choose_tn(n, f, h_p, block_n):
    """Pick the per-step sample tile (multiple of 8).

    * tiny N: one small tile;
    * otherwise: at least two grid steps (v7x megacore), capped by block_n and
      by a ~12 MiB VMEM budget (double-buffered X + out blocks + layer-1
      intermediates) so it fits v7x's 64 MiB VMEM with headroom.
    """
    n8 = _round_up(max(n, 1), 8)
    if n8 <= 128:
        return n8
    tn = max(128, min(block_n, _round_up((n + 1) // 2, 128)))

    def vmem_est(t):
        x_bytes = 2 * t * f * 4          # double-buffered f32 X block
        inter = 2 * t * h_p * 4          # layer-1 activations (+ slack)
        out_bytes = 2 * t * 4            # double-buffered f32 output block
        return x_bytes + inter + out_bytes

    budget = 12 * 1024 * 1024
    while tn > 128 and vmem_est(tn) > budget:
        tn -= 128
    return tn


def nn_forward(x, w1, b1, w2, b2, *, block_n=1024, use_bf16=True):
    """Forward pass of the NN.

    x:  [N, F] float32
    w1: [F, H], b1: [1, H]
    w2: [H, 1], b2: [1, 1]
    returns: [N] float32

    Note: use_bf16=True runs layer-1 MXU operands in bf16 (f32 accumulation);
    the original PyTorch module is f32 throughout — set use_bf16=False for
    closer parity (no wall-time cost: the kernel is memory-bound).
    """
    n, f = x.shape
    f_w, h = w1.shape
    assert f_w == f

    h_p = _round_up(h, _LANE)
    mm_dtype = jnp.bfloat16 if use_bf16 else jnp.float32

    # Weight-side padding only (tiny, VMEM-resident, amortized over all tiles).
    # Padded hidden units: zero W1 cols + zero b1 -> relu(0) = 0 -> zero w2
    # entries -> exact.
    w1_p = jnp.zeros((f, h_p), mm_dtype).at[:, :h].set(w1.astype(mm_dtype))
    b1_p = jnp.zeros((1, h_p), jnp.float32).at[:, :h].set(b1.astype(jnp.float32))
    w2_row = jnp.zeros((1, h_p), jnp.float32).at[:, :h].set(
        w2.astype(jnp.float32).reshape(1, h))
    b2_p = b2.astype(jnp.float32).reshape(1, 1)

    tn = _choose_tn(n, f, h_p, block_n)
    num_tiles = pl.cdiv(n, tn)
    grid = (num_tiles,)

    w1_itemsize = jnp.dtype(mm_dtype).itemsize
    cost = pl.CostEstimate(
        flops=2 * n * f * h_p + 2 * n * h_p,
        transcendentals=0,
        bytes_accessed=(n * f * 4                 # X read (f32, direct)
                        + f * h_p * w1_itemsize   # W1
                        + 2 * h_p * 4 + 4         # b1, w2^T, b2
                        + n * 4),                 # lane-dense output
    )

    out = pl.pallas_call(
        _mlp_kernel,
        out_shape=jax.ShapeDtypeStruct((num_tiles, 1, tn), jnp.float32),
        grid=grid,
        in_specs=[
            pl.BlockSpec((tn, f), lambda i: (i, 0)),     # X: tiled samples, f32 from HBM
            pl.BlockSpec((f, h_p), lambda i: (0, 0)),    # W1: VMEM-resident
            pl.BlockSpec((1, h_p), lambda i: (0, 0)),    # b1: VMEM-resident
            pl.BlockSpec((1, h_p), lambda i: (0, 0)),    # w2^T: VMEM-resident
            pl.BlockSpec((1, 1), lambda i: (0, 0)),      # b2: VMEM-resident
        ],
        out_specs=pl.BlockSpec((1, 1, tn), lambda i: (i, 0, 0)),
        compiler_params=pltpu.CompilerParams(
            dimension_semantics=("parallel",),
            vmem_limit_bytes=32 * 1024 * 1024,
        ),
        cost_estimate=cost,
    )(x.astype(jnp.float32), w1_p, b1_p, w2_row, b2_p)

    # (num_tiles, 1, tn) -> flat contiguous samples -> first n rows.
    return out.reshape(-1)[:n]


def init_params(num_features, hidden, seed=0):
    """Deterministic parameter initialization (synthetic, not a checkpoint)."""
    k1, k2, k3, k4 = jax.random.split(jax.random.PRNGKey(seed), 4)
    w1 = jax.random.normal(k1, (num_features, hidden), jnp.float32) * 0.1
    b1 = jax.random.normal(k2, (1, hidden), jnp.float32) * 0.01
    w2 = jax.random.normal(k3, (hidden, 1), jnp.float32) * 0.1
    b2 = jax.random.normal(k4, (1, 1), jnp.float32) * 0.01
    return w1, b1, w2, b2


if __name__ == "__main__":
    N, F, H = 8, 32, 32  # small shapes consistent with [num_samples, num_features]

    key = jax.random.PRNGKey(0)
    x = jax.random.normal(key, (N, F), jnp.float32)
    w1, b1, w2, b2 = init_params(F, H, seed=0)

    y = jax.block_until_ready(nn_forward(x, w1, b1, w2, b2))

    # Pure-JAX reference using the same numeric path (bf16 layer-1 operands,
    # f32 accumulation, f32 bias/ReLU, f32 layer 2).
    xb, w1b = x.astype(jnp.bfloat16), w1.astype(jnp.bfloat16)
    h_ref = jnp.maximum(
        jnp.dot(xb, w1b, preferred_element_type=jnp.float32) + b1, 0.0)
    ref = (jnp.dot(h_ref, w2, preferred_element_type=jnp.float32) + b2)[:, 0]

    assert y.shape == (N,)
    assert jnp.allclose(y, ref, atol=2e-3, rtol=2e-3)

    print("KERNEL_OK")
</pallas_src>

<mosaic_0001>
module attributes {stable_mosaic.version = 11 : i64} {
  func.func @_mlp_kernel(%arg0: i32, %arg1: memref<8x32xf32, #tpu.memory_space<vmem>>, %arg2: memref<32x128xbf16, #tpu.memory_space<vmem>>, %arg3: memref<1x128xf32, #tpu.memory_space<vmem>>, %arg4: memref<1x128xf32, #tpu.memory_space<vmem>>, %arg5: memref<1x1xf32, #tpu.memory_space<vmem>>, %arg6: memref<1x1x8xf32, #tpu.memory_space<vmem>>) attributes {dimension_semantics = [#tpu.dimension_semantics<parallel>], iteration_bounds = array<i64: 1>, scalar_prefetch = 0 : i64, scratch_operands = 0 : i64, tpu.core_type = #tpu.core_type<tc>, window_params = [{transform_indices = @transform_0, window_bounds = array<i64: 8, 32>}, {pipeline_mode = #tpu.pipeline_mode<synchronous>, transform_indices = @transform_1, window_bounds = array<i64: 32, 128>}, {pipeline_mode = #tpu.pipeline_mode<synchronous>, transform_indices = @transform_2, window_bounds = array<i64: 1, 128>}, {pipeline_mode = #tpu.pipeline_mode<synchronous>, transform_indices = @transform_3, window_bounds = array<i64: 1, 128>}, {pipeline_mode = #tpu.pipeline_mode<synchronous>, transform_indices = @transform_4, window_bounds = array<i64: 1, 1>}, {transform_indices = @transform_5, window_bounds = array<i64: 1, 1, 8>}]} {
    %c0 = arith.constant 0 : index
    %c0_0 = arith.constant 0 : index
    %0 = vector.load %arg1[%c0, %c0_0] : memref<8x32xf32, #tpu.memory_space<vmem>>, vector<8x32xf32>
    %1 = arith.truncf %0 : vector<8x32xf32> to vector<8x32xbf16>
    %c0_1 = arith.constant 0 : index
    %c0_2 = arith.constant 0 : index
    %2 = vector.load %arg2[%c0_1, %c0_2] : memref<32x128xbf16, #tpu.memory_space<vmem>>, vector<32x128xbf16>
    %cst = arith.constant dense<0.000000e+00> : vector<8x128xf32>
    %3 = tpu.matmul %1, %2, %cst {dimension_numbers = #tpu.dot_dimension_numbers<[1], [0], [0], [1], [0, 0, 1, 1], [], []>} : vector<8x32xbf16>, vector<32x128xbf16>, vector<8x128xf32> -> vector<8x128xf32>
    %c0_3 = arith.constant 0 : index
    %c0_4 = arith.constant 0 : index
    %4 = vector.load %arg3[%c0_3, %c0_4] : memref<1x128xf32, #tpu.memory_space<vmem>>, vector<1x128xf32>
    %5 = vector.broadcast %4 : vector<1x128xf32> to vector<8x128xf32>
    %6 = arith.addf %3, %5 : vector<8x128xf32>
    %cst_5 = arith.constant 0.000000e+00 : f32
    %7 = vector.broadcast %cst_5 : f32 to vector<8x128xf32>
    %8 = arith.maximumf %6, %7 : vector<8x128xf32>
    %c0_6 = arith.constant 0 : index
    %c0_7 = arith.constant 0 : index
    %9 = vector.load %arg4[%c0_6, %c0_7] : memref<1x128xf32, #tpu.memory_space<vmem>>, vector<1x128xf32>
    %cst_8 = arith.constant dense<0.000000e+00> : vector<1x8xf32>
    %10 = tpu.matmul %9, %8, %cst_8 {dimension_numbers = #tpu.dot_dimension_numbers<[1], [1], [0], [0], [0, 0, 1, 0], [], []>} : vector<1x128xf32>, vector<8x128xf32>, vector<1x8xf32> -> vector<1x8xf32>
    %c0_9 = arith.constant 0 : index
    %c0_10 = arith.constant 0 : index
    %11 = vector.load %arg5[%c0_9, %c0_10] : memref<1x1xf32, #tpu.memory_space<vmem>>, vector<1x1xf32>
    %12 = vector.broadcast %11 : vector<1x1xf32> to vector<1x8xf32>
    %13 = arith.addf %10, %12 : vector<1x8xf32>
    %14 = vector.shape_cast %13 : vector<1x8xf32> to vector<1x1x8xf32>
    %c0_11 = arith.constant 0 : index
    %c0_12 = arith.constant 0 : index
    %c0_13 = arith.constant 0 : index
    %15 = vector.load %arg6[%c0_11, %c0_12, %c0_13] : memref<1x1x8xf32, #tpu.memory_space<vmem>>, vector<1x1x8xf32>
    tpu.vector_store %arg6[%c0_11, %c0_12, %c0_13], %14 {strides = array<i32>} : memref<1x1x8xf32, #tpu.memory_space<vmem>>, vector<1x1x8xf32>,
    return
  }
  func.func @transform_0(%arg0: i32) -> (i32, i32) {
    %c0_i32 = arith.constant 0 : i32
    %c0_i32_0 = arith.constant 0 : i32
    return %arg0, %c0_i32 : i32, i32
  }
  func.func @transform_1(%arg0: i32) -> (i32, i32) {
    %c0_i32 = arith.constant 0 : i32
    %c0_i32_0 = arith.constant 0 : i32
    %c0_i32_1 = arith.constant 0 : i32
    return %c0_i32, %c0_i32_0 : i32, i32
  }
  func.func @transform_2(%arg0: i32) -> (i32, i32) {
    %c0_i32 = arith.constant 0 : i32
    %c0_i32_0 = arith.constant 0 : i32
    %c0_i32_1 = arith.constant 0 : i32
    return %c0_i32, %c0_i32_0 : i32, i32
  }
  func.func @transform_3(%arg0: i32) -> (i32, i32) {
    %c0_i32 = arith.constant 0 : i32
    %c0_i32_0 = arith.constant 0 : i32
    %c0_i32_1 = arith.constant 0 : i32
    return %c0_i32, %c0_i32_0 : i32, i32
  }
  func.func @transform_4(%arg0: i32) -> (i32, i32) {
    %c0_i32 = arith.constant 0 : i32
    %c0_i32_0 = arith.constant 0 : i32
    %c0_i32_1 = arith.constant 0 : i32
    return %c0_i32, %c0_i32_0 : i32, i32
  }
  func.func @transform_5(%arg0: i32) -> (i32, i32, i32) {
    %c0_i32 = arith.constant 0 : i32
    %c0_i32_0 = arith.constant 0 : i32
    %c0_i32_1 = arith.constant 0 : i32
    return %arg0, %c0_i32, %c0_i32_0 : i32, i32, i32
  }
}

</mosaic_0001>

<llo_original>
// kernel: tpu_custom_call.1
$region0: #{tpu_custom_call.1}
  #allocation0 [shape = 'u32[]', space=smem, size = 0x4, offset = 0x4, fixed_abs, tag = 'smem constant byte address 0x4 - core index']
  #allocation1 [shape = 'u32[144,128]{1,0:T(1,128)}', space=vmem, size = 0x12000, scoped, tag = 'internal scratch']
  #allocation2 [shape = 'f32[1,1]{1,0:T(1,128)S(1)}', space=vmem, size = 0x200, scoped, tag = 'scoped memory for tpu_custom_call.1']
  %s0 = inlined_call_operand.hbm [shape: f32[8,32], index: 0, kind: input, shape index: {}]
  %s1 = inlined_call_operand.hbm [shape: bf16[32,128], index: 1, kind: input, shape index: {}]
  %s2 = inlined_call_operand.vmem [shape: f32[1,128], index: 2, kind: input, shape index: {}]
  %s3 = inlined_call_operand.vmem [shape: f32[1,128], index: 3, kind: input, shape index: {}]
  %s4 = inlined_call_operand.<no memory space> [shape: f32[1,1], index: 4, kind: input, shape index: {}]
  %s5 = inlined_call_operand.hbm [shape: f32[1,1,8], index: 5, kind: output, shape index: {}]
  %s6 = sld [smem:[#allocation0]]
  $region38: #{tpu_custom_call.1} parent=0
    _
  %s8 = ssub.s32 1, %s6
  %s9 = scalar_select 0, %s8, %s6
  %v10 = vstv %s4
  %11 = vst [vmem:[#allocation2] sm:$0x1] %v10
  $region1: #{tpu_custom_call.1} parent=0
    #allocation3 [shape = 'u8[4096]{0}', space=vmem, size = 0x1000, scoped, tag = 'input window, operand 0, single buffered']
    #allocation4 [shape = 's32[1]{0}', space=sflag, size = 0x4, scoped, tag = 'scoped memory for tpu_custom_call.1']
    #allocation5 [shape = 's32[1]{0}', space=sflag, size = 0x4, scoped, tag = 'scoped memory for tpu_custom_call.1']
    #allocation6 [shape = 'u8[8192]{0}', space=vmem, size = 0x2000, scoped, tag = 'input window, operand 1, single buffered']
    #allocation7 [shape = 's32[1]{0}', space=sflag, size = 0x4, scoped, tag = 'scoped memory for tpu_custom_call.1']
    #allocation8 [shape = 'u8[512]{0}', space=vmem, size = 0x400, scoped, tag = 'output window, operand 0, single buffered']
    %12 = vsyncpa [#allocation4], 0
    %13 = vsyncpa [#allocation7], 0
    %14 = vsyncpa [#allocation5], 0
    // Predicated region
    $region2: #{tpu_custom_call.1} parent=1 // pred_check
      _
    $region3: #{tpu_custom_call.1} parent=1 // pred_check_branch
      %16 = sbr.rel (0) target = $region5
    $region4: #{tpu_custom_call.1} parent=1 // pred_region
      %s18 = ssub.s32 128, 128
      %19 = vsyncadd [#allocation4], %s18
      %s21 = sshll.u32 [#allocation3], 4
      %s22 = int_to_ptr.vmem [resolvable:$true] %s21
      %24 = dma.hbm_to_vmem [thread:$0]  %s0, 128, %s22, [#allocation4]
    $region5: #{tpu_custom_call.1} parent=1 // pred_fallthru
      _
    // Predicated region
    $region6: #{tpu_custom_call.1} parent=1 // pred_check
      _
    $region7: #{tpu_custom_call.1} parent=1 // pred_check_branch
      %26 = sbr.rel (0) target = $region9
    $region8: #{tpu_custom_call.1} parent=1 // pred_region
      %s28 = ssub.s32 256, 256
      %29 = vsyncadd [#allocation7], %s28
      %s30 = sshll.u32 [#allocation6], 4
      %s31 = int_to_ptr.vmem [resolvable:$true] %s30
      %36 = dma.hbm_to_vmem [thread:$0]  %s1, 256, %s31, [#allocation7], 64, 64, 4
    $region9: #{tpu_custom_call.1} parent=1 // pred_fallthru
      _
    // Predicated region
    $region10: #{tpu_custom_call.1} parent=1 // pred_check
      _
    $region11: #{tpu_custom_call.1} parent=1 // pred_check_branch
      %38 = sbr.rel (0) target = $region13
    $region12: #{tpu_custom_call.1} parent=1 // pred_region
      _
    $region13: #{tpu_custom_call.1} parent=1 // pred_fallthru
      _
    // Predicated region
    $region14: #{tpu_custom_call.1} parent=1 // pred_check
      _
    $region15: #{tpu_custom_call.1} parent=1 // pred_check_branch
      %40 = sbr.rel (0) target = $region17
    $region16: #{tpu_custom_call.1} parent=1 // pred_region
      _
    $region17: #{tpu_custom_call.1} parent=1 // pred_fallthru
      _
    // Predicated region
    $region18: #{tpu_custom_call.1} parent=1 // pred_check
      _
    $region19: #{tpu_custom_call.1} parent=1 // pred_check_branch
      %42 = sbr.rel (0) target = $region21
    $region20: #{tpu_custom_call.1} parent=1 // pred_region
      _
    $region21: #{tpu_custom_call.1} parent=1 // pred_fallthru
      _
    // Predicated region
    $region22: #{tpu_custom_call.1} parent=1 // pred_check
      _
    $region23: #{tpu_custom_call.1} parent=1 // pred_check_branch
      %44 = sbr.rel (0) target = $region25
    $region24: #{tpu_custom_call.1} parent=1 // pred_region
      %45 = dma.done [#allocation4], 128
    $region25: #{tpu_custom_call.1} parent=1 // pred_fallthru
      _
    // Predicated region
    $region26: #{tpu_custom_call.1} parent=1 // pred_check
      _
    $region27: #{tpu_custom_call.1} parent=1 // pred_check_branch
      %47 = sbr.rel (0) target = $region29
    $region28: #{tpu_custom_call.1} parent=1 // pred_region
      %48 = dma.done [#allocation7], 256
    $region29: #{tpu_custom_call.1} parent=1 // pred_fallthru
      _
    %v50 = vld [vmem:[#allocation3] sm:$0xff]
    %v51 = vpack.c.bf16 %v50, %v50
    %v52 = vld [vmem:[#allocation6] sm:$0xf]
    %v53 = vld [vmem:[#allocation6 + $0x4] sm:$0xf]
    %v54 = vld [vmem:[#allocation6 + $0x8] sm:$0xf]
    %v55 = vld [vmem:[#allocation6 + $0xc] sm:$0xf]
    %v56 = vld [vmem:[%s2] sm:$0x1]
    %v58 = vlaneseq
    %v59 = vshrl.u32 %v58, 7
    %v60 = vsub.s32 0, %v59
    %v61 = vrot.slane %v56, %v60
    %v67 = vunpack.c.l.b16 %v52
    %v68 = vunpack.c.l.b16 %v53
    %v69 = vunpack.c.l.b16 %v54
    %v70 = vunpack.c.l.b16 %v55
    %v71 = vpack.c.b16 %v68, %v67
    %v72 = vpack.c.b16 %v70, %v69
    %vm75 = vcmask 261120
    %v77 = vsel %vm75, %v51, 0
    %79 = vmatprep.subr.bf16.mxu0 0
    %80 = vmatpush1.bf16.msra.mxu0 %v71
    %81 = vmatprep.subr.bf16.mxu0 0
    %82 = vmatpush1.bf16.msra.mxu0 %v72
    %83 = vmatprep.subr.bf16.mxu0 0
    %84 = vmatpush1.bf16.msra.mxu0 0
    %85 = vmatprep.subr.bf16.mxu0 0
    %86 = vmatpush1.bf16.msra.mxu0 0
    %87 = vmatprep.subr.bf16.mxu0 0
    %88 = vmatpush1.bf16.msra.mxu0 0
    %89 = vmatprep.subr.bf16.mxu0 0
    %90 = vmatpush1.bf16.msra.mxu0 0
    %91 = vmatprep.subr.bf16.mxu0 0
    %92 = vmatpush1.bf16.msra.mxu0 0
    %93 = vmatprep.subr.bf16.mxu0 0
    %94 = vmatpush1.bf16.msra.mxu0 0
    %95 = vmatprep.subr.bf16.mxu0 0
    %96 = vmatpush1.bf16.msra.mxu0 0
    %97 = vmatprep.subr.bf16.mxu0 0
    %98 = vmatpush1.bf16.msra.mxu0 0
    %99 = vmatprep.subr.bf16.mxu0 0
    %100 = vmatpush1.bf16.msra.mxu0 0
    %101 = vmatprep.subr.bf16.mxu0 0
    %102 = vmatpush1.bf16.msra.mxu0 0
    %103 = vmatprep.subr.bf16.mxu0 0
    %104 = vmatpush1.bf16.msra.mxu0 0
    %105 = vmatprep.subr.bf16.mxu0 0
    %106 = vmatpush1.bf16.msra.mxu0 0
    %107 = vmatprep.subr.bf16.mxu0 0
    %108 = vmatpush1.bf16.msra.mxu0 0
    %109 = vmatprep.subr.bf16.mxu0 0
    %110 = vmatpush1.bf16.msra.mxu0 0
    %111 = vmatprep.mubr.bf16.mxu0 0
    %112 = vmatmul.mubr.bf16.gmra.mrb[0].mxu0 %v77
    %v113 = vpop.f32.mrb[0].mxu0
    %v114 = vadd.f32 %v61, %v113
    %v115 = vpop.f32.mrb[0].mxu0
    %v116 = vpop.f32.mrb[0].mxu0
    %v117 = vpop.f32.mrb[0].mxu0
    %118 = vdwg.mxu0
    %v119 = vmax.f32 %v114, 0.0
    %v120 = vld [vmem:[%s3] sm:$0x1]
    %v121 = vld [vmem:[#allocation2] sm:$0x1]
    %123 = vset.pattern.permute.xlu0 0
    %124 = vperm.xlu0 %123, %v121
    %v125 = vpop.permute.xlu0 %124
    %v127 = vlaneseq
    %v128 = vshrl.u32 %v127, 7
    %v129 = vsub.s32 0, %v128
    %v130 = vrot.slane %v125, %v129
    %131 = vmatprep.subr.mxu0 0.0
    %132 = vmatpush1.xpose.msra.mxu0 %v119
    %133 = vmatprep.subr.mxu0 0.0
    %134 = vmatpush1.xpose.msra.mxu0 0.0
    %135 = vmatprep.subr.mxu0 0.0
    %136 = vmatpush1.xpose.msra.mxu0 0.0
    %137 = vmatprep.subr.mxu0 0.0
    %138 = vmatpush1.xpose.msra.mxu0 0.0
    %139 = vmatprep.subr.mxu0 0.0
    %140 = vmatpush1.xpose.msra.mxu0 0.0
    %141 = vmatprep.subr.mxu0 0.0
    %142 = vmatpush1.xpose.msra.mxu0 0.0
    %143 = vmatprep.subr.mxu0 0.0
    %144 = vmatpush1.xpose.msra.mxu0 0.0
    %145 = vmatprep.subr.mxu0 0.0
    %146 = vmatpush1.xpose.msra.mxu0 0.0
    %147 = vmatprep.subr.mxu0 0.0
    %148 = vmatpush1.xpose.msra.mxu0 0.0
    %149 = vmatprep.subr.mxu0 0.0
    %150 = vmatpush1.xpose.msra.mxu0 0.0
    %151 = vmatprep.subr.mxu0 0.0
    %152 = vmatpush1.xpose.msra.mxu0 0.0
    %153 = vmatprep.subr.mxu0 0.0
    %154 = vmatpush1.xpose.msra.mxu0 0.0
    %155 = vmatprep.subr.mxu0 0.0
    %156 = vmatpush1.xpose.msra.mxu0 0.0
    %157 = vmatprep.subr.mxu0 0.0
    %158 = vmatpush1.xpose.msra.mxu0 0.0
    %159 = vmatprep.subr.mxu0 0.0
    %160 = vmatpush1.xpose.msra.mxu0 0.0
    %161 = vmatprep.subr.mxu0 0.0
    %162 = vmatpush1.xpose.msra.mxu0 0.0
    %163 = vmatprep.subr.mxu0 0.0
    %164 = vmatpush1.xpose.msra.mxu0 0.0
    %165 = vmatprep.subr.mxu0 0.0
    %166 = vmatpush1.xpose.msra.mxu0 0.0
    %167 = vmatprep.subr.mxu0 0.0
    %168 = vmatpush1.xpose.msra.mxu0 0.0
    %169 = vmatprep.subr.mxu0 0.0
    %170 = vmatpush1.xpose.msra.mxu0 0.0
    %171 = vmatprep.subr.mxu0 0.0
    %172 = vmatpush1.xpose.msra.mxu0 0.0
    %173 = vmatprep.subr.mxu0 0.0
    %174 = vmatpush1.xpose.msra.mxu0 0.0
    %175 = vmatprep.subr.mxu0 0.0
    %176 = vmatpush1.xpose.msra.mxu0 0.0
    %177 = vmatprep.subr.mxu0 0.0
    %178 = vmatpush1.xpose.msra.mxu0 0.0
    %179 = vmatprep.subr.mxu0 0.0
    %180 = vmatpush1.xpose.msra.mxu0 0.0
    %181 = vmatprep.subr.mxu0 0.0
    %182 = vmatpush1.xpose.msra.mxu0 0.0
    %183 = vmatprep.subr.mxu0 0.0
    %184 = vmatpush1.xpose.msra.mxu0 0.0
    %185 = vmatprep.subr.mxu0 0.0
    %186 = vmatpush1.xpose.msra.mxu0 0.0
    %187 = vmatprep.subr.mxu0 0.0
    %188 = vmatpush1.xpose.msra.mxu0 0.0
    %189 = vmatprep.subr.mxu0 0.0
    %190 = vmatpush1.xpose.msra.mxu0 0.0
    %191 = vmatprep.subr.mxu0 0.0
    %192 = vmatpush1.xpose.msra.mxu0 0.0
    %193 = vmatprep.subr.mxu0 0.0
    %194 = vmatpush1.xpose.msra.mxu0 0.0
    %195 = vmatprep.mubr.f32.mxu0 0.0
    %196 = vmatmul.mubr.f32.gmra.mrb[0].mxu0 %v120
    %v197 = vpop.f32.mrb[0].mxu0
    %v198 = vadd.f32 %v130, %v197
    %v199 = vpop.f32.mrb[0].mxu0
    %200 = vdwg.mxu0
    %vm201 = vcmask 57344
    %202 = vst.msk [vmem:[#allocation8] sm:$0x1] %vm201, %v198
    // Predicated region
    $region30: #{tpu_custom_call.1} parent=1 // pred_check
      _
    $region31: #{tpu_custom_call.1} parent=1 // pred_check_branch
      %204 = sbr.rel (0) target = $region33
    $region32: #{tpu_custom_call.1} parent=1 // pred_region
      %s206 = ssub.s32 16, 16
      %207 = vsyncadd [#allocation5], %s206
      %s209 = sshll.u32 [#allocation8], 4
      %s210 = int_to_ptr.vmem [resolvable:$true] %s209
      %212 = dma.vmem_to_hbm [thread:$0]  %s210, 16, %s5, [#allocation5]
    $region33: #{tpu_custom_call.1} parent=1 // pred_fallthru
      _
    // Predicated region
    $region34: #{tpu_custom_call.1} parent=1 // pred_check
      _
    $region35: #{tpu_custom_call.1} parent=1 // pred_check_branch
      %214 = sbr.rel (0) target = $region37
    $region36: #{tpu_custom_call.1} parent=1 // pred_region
      %215 = dma.done [#allocation5], 16
    $region37: #{tpu_custom_call.1} parent=1 // pred_fallthru
      _
    %216 = vsyncpa [#allocation4], 1
    %217 = vsyncpa [#allocation7], 1
    %218 = vsyncpa [#allocation5], 1

</llo_original>
